<compile_context>
chip_gen: v6e
topology: v6e:2x2x1
jax: 0.10.0
libtpu: 0.0.40
codegen_flags: <defaults>
</compile_context>

<pallas_src>
import functools

import jax
import jax.numpy as jnp
from jax import lax
from jax.experimental import pallas as pl
from jax.experimental.pallas import tpu as pltpu


def _cdiv(a, b):
    return (a + b - 1) // b


def _round_up(n, m):
    return ((n + m - 1) // m) * m


def _vmem_capacity_bytes():
    # Generation-aware budget: 128 MiB on v5e/v6e, 64 MiB on v7x.
    try:
        return int(pltpu.get_tpu_info().vmem_capacity_bytes)
    except Exception:
        return 64 * 1024 * 1024  # conservative (v7x-sized) fallback


# --------------------------------------------------------------------------
# Kernels
# --------------------------------------------------------------------------
def _masked_gen_kernel(x_ref, w1_ref, b1_ref, w2_ref, b2_ref, o_ref, *,
                       compute_dtype):
    # x arrives in its native dtype; cast to the MXU compute dtype in-kernel.
    x = x_ref[...].astype(compute_dtype)
    h = jnp.dot(x, w1_ref[...], preferred_element_type=jnp.float32)
    h = jnp.maximum(h + b1_ref[...], 0.0)                     # (TB,128)+(1,128)
    # Output mask is pre-folded into W2/b2 (zeroed columns), tanh(0)=0.
    y = jnp.dot(h.astype(w2_ref.dtype), w2_ref[...],
                preferred_element_type=jnp.float32)
    o_ref[...] = jnp.tanh(y + b2_ref[...]).astype(o_ref.dtype)


def _masked_gen_kernel_ktiled(x_ref, w1_ref, b1_ref, w2_ref, b2_ref, o_ref,
                              acc_ref, *, compute_dtype, input_dim, tile_k):
    # Fallback for large input_dim: W1 is streamed along K, hidden activations
    # are accumulated in an f32 VMEM scratch.
    k = pl.program_id(1)

    @pl.when(k == 0)
    def _():
        acc_ref[...] = jnp.zeros_like(acc_ref)

    x = x_ref[...].astype(compute_dtype)
    if input_dim % tile_k != 0:
        # Zero the ragged K tail of the last block so garbage (possibly NaN)
        # never reaches the accumulator.  W1 is zero-padded along K on host.
        col = lax.broadcasted_iota(jnp.int32, x.shape, 1)
        valid = input_dim - k * tile_k
        x = jnp.where(col < valid, x, jnp.zeros_like(x))
    acc_ref[...] += jnp.dot(x, w1_ref[...], preferred_element_type=jnp.float32)

    @pl.when(k == pl.num_programs(1) - 1)
    def _():
        h = jnp.maximum(acc_ref[...] + b1_ref[...], 0.0)
        y = jnp.dot(h.astype(w2_ref.dtype), w2_ref[...],
                    preferred_element_type=jnp.float32)
        o_ref[...] = jnp.tanh(y + b2_ref[...]).astype(o_ref.dtype)


# --------------------------------------------------------------------------
# Wrapper
# --------------------------------------------------------------------------
def masked_generator(x, w1, b1, w2, b2, mask, *, tile_b=None, tile_k=None,
                     compute_dtype=jnp.bfloat16):
    """x: (B, input_dim); w1: (input_dim, 128); b1: (128,);
    w2: (128, output_dim); b2: (output_dim,); mask: (output_dim,)."""
    B, input_dim = x.shape
    hidden = w1.shape[1]
    output_dim = w2.shape[1]
    out_dtype = x.dtype

    xbytes = jnp.dtype(x.dtype).itemsize
    obytes = jnp.dtype(out_dtype).itemsize
    cbytes = jnp.dtype(compute_dtype).itemsize
    # Sublane multiple for the blocks that actually live in VMEM (x / out).
    sub = max(8, 8 * (4 // min(xbytes, obytes)))

    # --- Fold the mask into the second linear layer (tanh(0)=0 keeps masked
    # --- columns exactly zero).
    mask_f = mask.astype(jnp.float32)
    w2m = w2.astype(jnp.float32) * mask_f[None, :]
    b2m = b2.astype(jnp.float32) * mask_f

    # --- Conditional output lane padding: only pad when write amplification
    # --- is small (<= 1.5x).  Tiny output_dim keeps its natural last dim
    # --- (legal: equals the full array dim) and accepts masked stores.
    out_eff = output_dim
    if output_dim % 128 != 0:
        padded = _round_up(output_dim, 128)
        if padded <= int(1.5 * output_dim):
            out_eff = padded
    if out_eff != output_dim:
        w2m = jnp.pad(w2m, ((0, 0), (0, out_eff - output_dim)))
        b2m = jnp.pad(b2m, ((0, out_eff - output_dim),))

    w1_host = w1.astype(compute_dtype)
    w2_c = w2m.astype(compute_dtype)
    b1_2d = b1.astype(jnp.float32).reshape(1, hidden)
    b2_2d = b2m.reshape(1, out_eff)

    # --- Generation-aware VMEM budget (leave headroom for Mosaic scratch).
    vmem_cap = _vmem_capacity_bytes()
    vmem_hi = int(vmem_cap * 0.80)                  # ~102 MiB v6e, ~51 MiB v7x
    budget = max(vmem_hi - 6 * 1024 * 1024, 24 * 1024 * 1024)

    resident_bytes = hidden * out_eff * cbytes + (hidden + out_eff) * 4
    w1_bytes = input_dim * hidden * cbytes
    per_row = 2 * input_dim * xbytes + 2 * out_eff * obytes + hidden * 4

    use_k = tile_k is not None
    avail = budget - 2 * (resident_bytes + w1_bytes)
    if not use_k and avail < per_row * min(256, _round_up(B, sub)):
        use_k = True     # resident W1 too large -> stream it along K instead

    fixed_k = 0
    n_k = 1
    if not use_k:
        cap_rows = max(sub, (avail // per_row) // sub * sub)
    else:
        if tile_k is None:
            tile_k = 512
        tile_k = max(128, (tile_k // 128) * 128)
        tile_k = min(tile_k, _round_up(input_dim, 128))
        k_pad = _round_up(input_dim, tile_k)
        n_k = k_pad // tile_k
        if k_pad != input_dim:
            # W1 is tiny; zero-pad its K axis so the ragged last K block
            # contributes exactly zero (x tail is masked in-kernel).
            w1_host = jnp.pad(w1_host, ((0, k_pad - input_dim), (0, 0)))
        per_row = 2 * tile_k * xbytes + 2 * out_eff * obytes + hidden * 4
        fixed_k = 2 * (tile_k * hidden * cbytes + resident_bytes)
        cap_rows = max(sub, ((budget - fixed_k) // per_row) // sub * sub)

    # --- Batch tile size: target >= ~2 MiB of DMA payload per grid step,
    # --- but keep at least 2 steps so both v7x TensorCores get work.
    if tile_b is None:
        payload_per_row = input_dim * xbytes + out_eff * obytes
        tile_b = _round_up(_cdiv(2 * 1024 * 1024, payload_per_row), sub)
        tile_b = min(tile_b, 8192)
        tile_b = min(tile_b, _round_up(_cdiv(B, 2), sub))
    else:
        tile_b = _round_up(tile_b, sub)
    tile_b = max(sub, min(tile_b, cap_rows, _round_up(B, sub)))

    n_tiles = _cdiv(B, tile_b)   # ragged last block handled by Pallas masking

    if use_k:
        usage = tile_b * per_row + fixed_k
    else:
        usage = tile_b * per_row + 2 * (resident_bytes + w1_bytes)
    vmem_limit = int(min(vmem_hi, max(32 * 1024 * 1024,
                                      usage + 8 * 1024 * 1024)))

    cost = pl.CostEstimate(
        flops=2 * B * (input_dim * hidden + hidden * out_eff),
        transcendentals=B * out_eff,
        bytes_accessed=(B * input_dim * xbytes
                        + int(w1_host.size) * cbytes + int(w2_c.size) * cbytes
                        + (hidden + out_eff) * 4
                        + B * out_eff * obytes),
    )

    if not use_k:
        kernel = functools.partial(_masked_gen_kernel,
                                   compute_dtype=compute_dtype)
        out = pl.pallas_call(
            kernel,
            out_shape=jax.ShapeDtypeStruct((B, out_eff), out_dtype),
            grid_spec=pltpu.PrefetchScalarGridSpec(
                num_scalar_prefetch=0,
                grid=(n_tiles,),
                in_specs=[
                    pl.BlockSpec((tile_b, input_dim), lambda i: (i, 0)),   # x (native dtype)
                    pl.BlockSpec((input_dim, hidden), lambda i: (0, 0)),   # W1 (resident)
                    pl.BlockSpec((1, hidden), lambda i: (0, 0)),           # b1
                    pl.BlockSpec((hidden, out_eff), lambda i: (0, 0)),     # W2*mask (resident)
                    pl.BlockSpec((1, out_eff), lambda i: (0, 0)),          # b2*mask
                ],
                out_specs=pl.BlockSpec((tile_b, out_eff), lambda i: (i, 0)),
            ),
            compiler_params=pltpu.CompilerParams(
                dimension_semantics=("parallel",),
                vmem_limit_bytes=vmem_limit),
            cost_estimate=cost,
        )(x, w1_host, b1_2d, w2_c, b2_2d)
    else:
        kernel = functools.partial(_masked_gen_kernel_ktiled,
                                   compute_dtype=compute_dtype,
                                   input_dim=input_dim, tile_k=tile_k)
        out = pl.pallas_call(
            kernel,
            out_shape=jax.ShapeDtypeStruct((B, out_eff), out_dtype),
            grid_spec=pltpu.PrefetchScalarGridSpec(
                num_scalar_prefetch=0,
                grid=(n_tiles, n_k),
                in_specs=[
                    pl.BlockSpec((tile_b, tile_k), lambda i, k: (i, k)),   # x K-block
                    pl.BlockSpec((tile_k, hidden), lambda i, k: (k, 0)),   # W1 K-block (streamed)
                    pl.BlockSpec((1, hidden), lambda i, k: (0, 0)),        # b1
                    pl.BlockSpec((hidden, out_eff), lambda i, k: (0, 0)),  # W2*mask (resident)
                    pl.BlockSpec((1, out_eff), lambda i, k: (0, 0)),       # b2*mask
                ],
                out_specs=pl.BlockSpec((tile_b, out_eff), lambda i, k: (i, 0)),
                scratch_shapes=[pltpu.VMEM((tile_b, hidden), jnp.float32)],
            ),
            compiler_params=pltpu.CompilerParams(
                dimension_semantics=("parallel", "arbitrary"),
                vmem_limit_bytes=vmem_limit),
            cost_estimate=cost,
        )(x, w1_host, b1_2d, w2_c, b2_2d)

    if out_eff != output_dim:
        out = out[:, :output_dim]
    return out


def masked_generator_ref(x, w1, b1, w2, b2, mask):
    h = jnp.maximum(x @ w1 + b1, 0.0)
    return jnp.tanh(h @ w2 + b2) * mask


if __name__ == "__main__":
    key = jax.random.PRNGKey(0)
    (k_x, k_w1, k_b1, k_w2, k_b2, k_m,
     k_x2, k_x3, k_w13, k_b13, k_w23, k_b23, k_m3) = jax.random.split(key, 13)

    batch = 8
    input_dim = 32
    hidden = 128
    output_dim = 32

    # Deterministic parameter init (synthetic, PyTorch-style uniform ranges).
    lim1 = 1.0 / jnp.sqrt(input_dim)
    w1 = jax.random.uniform(k_w1, (input_dim, hidden), jnp.float32, -lim1, lim1)
    b1 = jax.random.uniform(k_b1, (hidden,), jnp.float32, -lim1, lim1)
    lim2 = 1.0 / jnp.sqrt(hidden)
    w2 = jax.random.uniform(k_w2, (hidden, output_dim), jnp.float32, -lim2, lim2)
    b2 = jax.random.uniform(k_b2, (output_dim,), jnp.float32, -lim2, lim2)
    mask = (jax.random.uniform(k_m, (output_dim,)) > 0.5).astype(jnp.float32)

    # 1) Exact path (f32 compute) at the module's small shape.
    #    output_dim=32 keeps its natural last dim (no 4x write amplification).
    x = jax.random.normal(k_x, (batch, input_dim), dtype=jnp.float32)
    out = masked_generator(x, w1, b1, w2, b2, mask, compute_dtype=jnp.float32)
    out = jax.block_until_ready(out)
    ref = masked_generator_ref(x, w1, b1, w2, b2, mask)
    assert out.shape == (batch, output_dim)
    assert jnp.allclose(out, ref, atol=1e-5, rtol=1e-5), "f32 path mismatch"

    # 2) Default fast path (bf16 MXU, f32 accumulation, in-kernel cast) with a
    #    ragged batch so several grid steps and the masked tail block run.
    x2 = jax.random.normal(k_x2, (200, input_dim), dtype=jnp.float32)
    out2 = masked_generator(x2, w1, b1, w2, b2, mask, tile_b=64)
    out2 = jax.block_until_ready(out2)
    ref2 = masked_generator_ref(x2, w1, b1, w2, b2, mask)
    assert out2.shape == (200, output_dim)
    assert jnp.allclose(out2, ref2, atol=3e-2, rtol=5e-2), "bf16 path mismatch"

    # 3) K-tiled fallback path (forced via tile_k): ragged input_dim exercises
    #    the in-kernel K-tail masking; output_dim=192 exercises the conditional
    #    lane padding (192 -> 256, amplification 1.33 <= 1.5).
    in3, out3_dim, b3 = 200, 192, 64
    lim13 = 1.0 / jnp.sqrt(in3)
    w13 = jax.random.uniform(k_w13, (in3, hidden), jnp.float32, -lim13, lim13)
    b13 = jax.random.uniform(k_b13, (hidden,), jnp.float32, -lim13, lim13)
    w23 = jax.random.uniform(k_w23, (hidden, out3_dim), jnp.float32, -lim2, lim2)
    b23 = jax.random.uniform(k_b23, (out3_dim,), jnp.float32, -lim2, lim2)
    mask3 = (jax.random.uniform(k_m3, (out3_dim,)) > 0.5).astype(jnp.float32)
    x3 = jax.random.normal(k_x3, (b3, in3), dtype=jnp.float32)
    out3 = masked_generator(x3, w13, b13, w23, b23, mask3,
                            tile_k=128, compute_dtype=jnp.float32)
    out3 = jax.block_until_ready(out3)
    ref3 = masked_generator_ref(x3, w13, b13, w23, b23, mask3)
    assert out3.shape == (b3, out3_dim)
    assert jnp.allclose(out3, ref3, atol=2e-5, rtol=2e-5), "k-tiled path mismatch"

    print("KERNEL_OK")
</pallas_src>

<mosaic_0001>
module attributes {stable_mosaic.version = 11 : i64} {
  func.func @_masked_gen_kernel(%arg0: i32, %arg1: memref<8x32xf32, #tpu.memory_space<vmem>>, %arg2: memref<32x128xf32, #tpu.memory_space<vmem>>, %arg3: memref<1x128xf32, #tpu.memory_space<vmem>>, %arg4: memref<128x32xf32, #tpu.memory_space<vmem>>, %arg5: memref<1x32xf32, #tpu.memory_space<vmem>>, %arg6: memref<8x32xf32, #tpu.memory_space<vmem>>) attributes {dimension_semantics = [#tpu.dimension_semantics<parallel>], iteration_bounds = array<i64: 1>, scalar_prefetch = 0 : i64, scratch_operands = 0 : i64, tpu.core_type = #tpu.core_type<tc>, window_params = [{transform_indices = @transform_0, window_bounds = array<i64: 8, 32>}, {pipeline_mode = #tpu.pipeline_mode<synchronous>, transform_indices = @transform_1, window_bounds = array<i64: 32, 128>}, {pipeline_mode = #tpu.pipeline_mode<synchronous>, transform_indices = @transform_2, window_bounds = array<i64: 1, 128>}, {pipeline_mode = #tpu.pipeline_mode<synchronous>, transform_indices = @transform_3, window_bounds = array<i64: 128, 32>}, {pipeline_mode = #tpu.pipeline_mode<synchronous>, transform_indices = @transform_4, window_bounds = array<i64: 1, 32>}, {transform_indices = @transform_5, window_bounds = array<i64: 8, 32>}]} {
    %c0 = arith.constant 0 : index
    %c0_0 = arith.constant 0 : index
    %0 = vector.load %arg1[%c0, %c0_0] : memref<8x32xf32, #tpu.memory_space<vmem>>, vector<8x32xf32>
    %c0_1 = arith.constant 0 : index
    %c0_2 = arith.constant 0 : index
    %1 = vector.load %arg2[%c0_1, %c0_2] : memref<32x128xf32, #tpu.memory_space<vmem>>, vector<32x128xf32>
    %cst = arith.constant dense<0.000000e+00> : vector<8x128xf32>
    %2 = tpu.matmul %0, %1, %cst {dimension_numbers = #tpu.dot_dimension_numbers<[1], [0], [0], [1], [0, 0, 1, 1], [], []>} : vector<8x32xf32>, vector<32x128xf32>, vector<8x128xf32> -> vector<8x128xf32>
    %c0_3 = arith.constant 0 : index
    %c0_4 = arith.constant 0 : index
    %3 = vector.load %arg3[%c0_3, %c0_4] : memref<1x128xf32, #tpu.memory_space<vmem>>, vector<1x128xf32>
    %4 = vector.broadcast %3 : vector<1x128xf32> to vector<8x128xf32>
    %5 = arith.addf %2, %4 : vector<8x128xf32>
    %cst_5 = arith.constant 0.000000e+00 : f32
    %6 = vector.broadcast %cst_5 : f32 to vector<8x128xf32>
    %7 = arith.maximumf %5, %6 : vector<8x128xf32>
    %c0_6 = arith.constant 0 : index
    %c0_7 = arith.constant 0 : index
    %8 = vector.load %arg4[%c0_6, %c0_7] : memref<128x32xf32, #tpu.memory_space<vmem>>, vector<128x32xf32>
    %cst_8 = arith.constant dense<0.000000e+00> : vector<8x32xf32>
    %9 = tpu.matmul %7, %8, %cst_8 {dimension_numbers = #tpu.dot_dimension_numbers<[1], [0], [0], [1], [0, 0, 1, 1], [], []>} : vector<8x128xf32>, vector<128x32xf32>, vector<8x32xf32> -> vector<8x32xf32>
    %c0_9 = arith.constant 0 : index
    %c0_10 = arith.constant 0 : index
    %10 = vector.load %arg5[%c0_9, %c0_10] : memref<1x32xf32, #tpu.memory_space<vmem>>, vector<1x32xf32>
    %11 = vector.broadcast %10 : vector<1x32xf32> to vector<8x32xf32>
    %12 = arith.addf %9, %11 : vector<8x32xf32>
    %13 = math.tanh %12 : vector<8x32xf32>
    %c0_11 = arith.constant 0 : index
    %c0_12 = arith.constant 0 : index
    %14 = vector.load %arg6[%c0_11, %c0_12] : memref<8x32xf32, #tpu.memory_space<vmem>>, vector<8x32xf32>
    tpu.vector_store %arg6[%c0_11, %c0_12], %13 {strides = array<i32>} : memref<8x32xf32, #tpu.memory_space<vmem>>, vector<8x32xf32>,
    return
  }
  func.func @transform_0(%arg0: i32) -> (i32, i32) {
    %c0_i32 = arith.constant 0 : i32
    %c0_i32_0 = arith.constant 0 : i32
    return %arg0, %c0_i32 : i32, i32
  }
  func.func @transform_1(%arg0: i32) -> (i32, i32) {
    %c0_i32 = arith.constant 0 : i32
    %c0_i32_0 = arith.constant 0 : i32
    %c0_i32_1 = arith.constant 0 : i32
    return %c0_i32, %c0_i32_0 : i32, i32
  }
  func.func @transform_2(%arg0: i32) -> (i32, i32) {
    %c0_i32 = arith.constant 0 : i32
    %c0_i32_0 = arith.constant 0 : i32
    %c0_i32_1 = arith.constant 0 : i32
    return %c0_i32, %c0_i32_0 : i32, i32
  }
  func.func @transform_3(%arg0: i32) -> (i32, i32) {
    %c0_i32 = arith.constant 0 : i32
    %c0_i32_0 = arith.constant 0 : i32
    %c0_i32_1 = arith.constant 0 : i32
    return %c0_i32, %c0_i32_0 : i32, i32
  }
  func.func @transform_4(%arg0: i32) -> (i32, i32) {
    %c0_i32 = arith.constant 0 : i32
    %c0_i32_0 = arith.constant 0 : i32
    %c0_i32_1 = arith.constant 0 : i32
    return %c0_i32, %c0_i32_0 : i32, i32
  }
  func.func @transform_5(%arg0: i32) -> (i32, i32) {
    %c0_i32 = arith.constant 0 : i32
    %c0_i32_0 = arith.constant 0 : i32
    return %arg0, %c0_i32 : i32, i32
  }
}

</mosaic_0001>

<llo_original>
// kernel: tpu_custom_call.1
$region0: #{tpu_custom_call.1}
  #allocation0 [shape = 'u32[]', space=smem, size = 0x4, offset = 0x4, fixed_abs, tag = 'smem constant byte address 0x4 - core index']
  #allocation1 [shape = 'u32[144,128]{1,0:T(1,128)}', space=vmem, size = 0x12000, scoped, tag = 'internal scratch']
  %s0 = inlined_call_operand.vmem [shape: f32[8,32], index: 0, kind: input, shape index: {}]
  %s1 = inlined_call_operand.vmem [shape: f32[32,128], index: 1, kind: input, shape index: {}]
  %s2 = inlined_call_operand.vmem [shape: f32[1,128], index: 2, kind: input, shape index: {}]
  %s3 = inlined_call_operand.vmem [shape: f32[128,32], index: 3, kind: input, shape index: {}]
  %s4 = inlined_call_operand.vmem [shape: f32[1,32], index: 4, kind: input, shape index: {}]
  %s5 = inlined_call_operand.hbm [shape: f32[8,32], index: 5, kind: output, shape index: {}]
  %s6 = sld [smem:[#allocation0]]
  $region30: #{tpu_custom_call.1} parent=0
    _
  %s8 = ssub.s32 1, %s6
  %s9 = scalar_select 0, %s8, %s6
  $region1: #{tpu_custom_call.1} parent=0
    #allocation2 [shape = 'u8[4096]{0}', space=vmem, size = 0x1000, scoped, tag = 'output window, operand 0, single buffered']
    #allocation3 [shape = 's32[1]{0}', space=sflag, size = 0x4, scoped, tag = 'scoped memory for tpu_custom_call.1']
    %10 = vsyncpa [#allocation3], 0
    // Predicated region
    $region2: #{tpu_custom_call.1} parent=1 // pred_check
      _
    $region3: #{tpu_custom_call.1} parent=1 // pred_check_branch
      %12 = sbr.rel (0) target = $region5
    $region4: #{tpu_custom_call.1} parent=1 // pred_region
      _
    $region5: #{tpu_custom_call.1} parent=1 // pred_fallthru
      _
    // Predicated region
    $region6: #{tpu_custom_call.1} parent=1 // pred_check
      _
    $region7: #{tpu_custom_call.1} parent=1 // pred_check_branch
      %14 = sbr.rel (0) target = $region9
    $region8: #{tpu_custom_call.1} parent=1 // pred_region
      _
    $region9: #{tpu_custom_call.1} parent=1 // pred_fallthru
      _
    // Predicated region
    $region10: #{tpu_custom_call.1} parent=1 // pred_check
      _
    $region11: #{tpu_custom_call.1} parent=1 // pred_check_branch
      %16 = sbr.rel (0) target = $region13
    $region12: #{tpu_custom_call.1} parent=1 // pred_region
      _
    $region13: #{tpu_custom_call.1} parent=1 // pred_fallthru
      _
    // Predicated region
    $region14: #{tpu_custom_call.1} parent=1 // pred_check
      _
    $region15: #{tpu_custom_call.1} parent=1 // pred_check_branch
      %18 = sbr.rel (0) target = $region17
    $region16: #{tpu_custom_call.1} parent=1 // pred_region
      _
    $region17: #{tpu_custom_call.1} parent=1 // pred_fallthru
      _
    // Predicated region
    $region18: #{tpu_custom_call.1} parent=1 // pred_check
      _
    $region19: #{tpu_custom_call.1} parent=1 // pred_check_branch
      %20 = sbr.rel (0) target = $region21
    $region20: #{tpu_custom_call.1} parent=1 // pred_region
      _
    $region21: #{tpu_custom_call.1} parent=1 // pred_fallthru
      _
    %v21 = vld [vmem:[%s0] sm:$0xff]
    %v22 = vld [vmem:[%s1] sm:$0xff]
    %v23 = vld [vmem:[%s1 + $0x8] sm:$0xff]
    %v24 = vld [vmem:[%s1 + $0x10] sm:$0xff]
    %v25 = vld [vmem:[%s1 + $0x18] sm:$0xff]
    %v26 = vld [vmem:[%s2] sm:$0x1]
    %v28 = vlaneseq
    %v29 = vshrl.u32 %v28, 7
    %v30 = vsub.s32 0, %v29
    %v31 = vrot.slane %v26, %v30
    %vm33 = vcmask 261120
    %v35 = vsel %vm33, %v21, 0
    %37 = vmatprep.subr.mxu0 0.0
    %38 = vmatpush1.msra.mxu0 0.0
    %39 = vmatprep.subr.mxu0 0.0
    %40 = vmatpush1.msra.mxu0 0.0
    %41 = vmatprep.subr.mxu0 0.0
    %42 = vmatpush1.msra.mxu0 0.0
    %43 = vmatprep.subr.mxu0 0.0
    %44 = vmatpush1.msra.mxu0 0.0
    %45 = vmatprep.subr.mxu0 0.0
    %46 = vmatpush1.msra.mxu0 0.0
    %47 = vmatprep.subr.mxu0 0.0
    %48 = vmatpush1.msra.mxu0 0.0
    %49 = vmatprep.subr.mxu0 0.0
    %50 = vmatpush1.msra.mxu0 0.0
    %51 = vmatprep.subr.mxu0 0.0
    %52 = vmatpush1.msra.mxu0 0.0
    %53 = vmatprep.subr.mxu0 0.0
    %54 = vmatpush1.msra.mxu0 0.0
    %55 = vmatprep.subr.mxu0 0.0
    %56 = vmatpush1.msra.mxu0 0.0
    %57 = vmatprep.subr.mxu0 0.0
    %58 = vmatpush1.msra.mxu0 0.0
    %59 = vmatprep.subr.mxu0 0.0
    %60 = vmatpush1.msra.mxu0 0.0
    %61 = vmatprep.subr.mxu0 0.0
    %62 = vmatpush1.msra.mxu0 %v25
    %63 = vmatprep.subr.mxu0 0.0
    %64 = vmatpush1.msra.mxu0 %v24
    %65 = vmatprep.subr.mxu0 0.0
    %66 = vmatpush1.msra.mxu0 %v23
    %67 = vmatprep.subr.mxu0 0.0
    %68 = vmatpush1.msra.mxu0 %v22
    %69 = vmatprep.subr.mxu0 0.0
    %70 = vmatpush2.msra.mxu0 0.0
    %71 = vmatprep.subr.mxu0 0.0
    %72 = vmatpush2.msra.mxu0 0.0
    %73 = vmatprep.subr.mxu0 0.0
    %74 = vmatpush2.msra.mxu0 0.0
    %75 = vmatprep.subr.mxu0 0.0
    %76 = vmatpush2.msra.mxu0 0.0
    %77 = vmatprep.subr.mxu0 0.0
    %78 = vmatpush2.msra.mxu0 0.0
    %79 = vmatprep.subr.mxu0 0.0
    %80 = vmatpush2.msra.mxu0 0.0
    %81 = vmatprep.subr.mxu0 0.0
    %82 = vmatpush2.msra.mxu0 0.0
    %83 = vmatprep.subr.mxu0 0.0
    %84 = vmatpush2.msra.mxu0 0.0
    %85 = vmatprep.subr.mxu0 0.0
    %86 = vmatpush2.msra.mxu0 0.0
    %87 = vmatprep.subr.mxu0 0.0
    %88 = vmatpush2.msra.mxu0 0.0
    %89 = vmatprep.subr.mxu0 0.0
    %90 = vmatpush2.msra.mxu0 0.0
    %91 = vmatprep.subr.mxu0 0.0
    %92 = vmatpush2.msra.mxu0 0.0
    %93 = vmatprep.subr.mxu0 0.0
    %94 = vmatpush2.msra.mxu0 0.0
    %95 = vmatprep.subr.mxu0 0.0
    %96 = vmatpush2.msra.mxu0 0.0
    %97 = vmatprep.subr.mxu0 0.0
    %98 = vmatpush2.msra.mxu0 0.0
    %99 = vmatprep.subr.mxu0 0.0
    %100 = vmatpush2.msra.mxu0 0.0
    %101 = vmatprep.mubr.f32.mxu0 0.0
    %102 = vmatmul.mubr.f32.gmra.mxu0 %v35
    %v103 = vpop.f32.mrf.mxu0
    %v104 = vadd.f32 %v31, %v103
    %v105 = vpop.f32.mrf.mxu0
    %106 = vdwg.mxu0
    %v107 = vmax.f32 %v104, 0.0
    %v108 = vld [vmem:[%s3] sm:$0xff]
    %v109 = vld [vmem:[%s3 + $0x8] sm:$0xff]
    %v110 = vld [vmem:[%s3 + $0x10] sm:$0xff]
    %v111 = vld [vmem:[%s3 + $0x18] sm:$0xff]
    %v112 = vld [vmem:[%s3 + $0x20] sm:$0xff]
    %v113 = vld [vmem:[%s3 + $0x28] sm:$0xff]
    %v114 = vld [vmem:[%s3 + $0x30] sm:$0xff]
    %v115 = vld [vmem:[%s3 + $0x38] sm:$0xff]
    %v116 = vld [vmem:[%s3 + $0x40] sm:$0xff]
    %v117 = vld [vmem:[%s3 + $0x48] sm:$0xff]
    %v118 = vld [vmem:[%s3 + $0x50] sm:$0xff]
    %v119 = vld [vmem:[%s3 + $0x58] sm:$0xff]
    %v120 = vld [vmem:[%s3 + $0x60] sm:$0xff]
    %v121 = vld [vmem:[%s3 + $0x68] sm:$0xff]
    %v122 = vld [vmem:[%s3 + $0x70] sm:$0xff]
    %v123 = vld [vmem:[%s3 + $0x78] sm:$0xff]
    %v124 = vld [vmem:[%s4] sm:$0x1]
    %v126 = vlaneseq
    %v127 = vshrl.u32 %v126, 7
    %v128 = vsub.s32 0, %v127
    %v129 = vrot.slane %v124, %v128
    %131 = vmatprep.subr.mxu0 0.0
    %132 = vmatpush1.msra.mxu0 %v123
    %133 = vmatprep.subr.mxu0 0.0
    %134 = vmatpush1.msra.mxu0 %v122
    %135 = vmatprep.subr.mxu0 0.0
    %136 = vmatpush1.msra.mxu0 %v121
    %137 = vmatprep.subr.mxu0 0.0
    %138 = vmatpush1.msra.mxu0 %v120
    %139 = vmatprep.subr.mxu0 0.0
    %140 = vmatpush1.msra.mxu0 %v119
    %141 = vmatprep.subr.mxu0 0.0
    %142 = vmatpush1.msra.mxu0 %v118
    %143 = vmatprep.subr.mxu0 0.0
    %144 = vmatpush1.msra.mxu0 %v117
    %145 = vmatprep.subr.mxu0 0.0
    %146 = vmatpush1.msra.mxu0 %v116
    %147 = vmatprep.subr.mxu0 0.0
    %148 = vmatpush1.msra.mxu0 %v115
    %149 = vmatprep.subr.mxu0 0.0
    %150 = vmatpush1.msra.mxu0 %v114
    %151 = vmatprep.subr.mxu0 0.0
    %152 = vmatpush1.msra.mxu0 %v113
    %153 = vmatprep.subr.mxu0 0.0
    %154 = vmatpush1.msra.mxu0 %v112
    %155 = vmatprep.subr.mxu0 0.0
    %156 = vmatpush1.msra.mxu0 %v111
    %157 = vmatprep.subr.mxu0 0.0
    %158 = vmatpush1.msra.mxu0 %v110
    %159 = vmatprep.subr.mxu0 0.0
    %160 = vmatpush1.msra.mxu0 %v109
    %161 = vmatprep.subr.mxu0 0.0
    %162 = vmatpush1.msra.mxu0 %v108
    %163 = vmatprep.subr.mxu0 0.0
    %164 = vmatpush2.msra.mxu0 0.0
    %165 = vmatprep.subr.mxu0 0.0
    %166 = vmatpush2.msra.mxu0 0.0
    %167 = vmatprep.subr.mxu0 0.0
    %168 = vmatpush2.msra.mxu0 0.0
    %169 = vmatprep.subr.mxu0 0.0
    %170 = vmatpush2.msra.mxu0 0.0
    %171 = vmatprep.subr.mxu0 0.0
    %172 = vmatpush2.msra.mxu0 0.0
    %173 = vmatprep.subr.mxu0 0.0
    %174 = vmatpush2.msra.mxu0 0.0
    %175 = vmatprep.subr.mxu0 0.0
    %176 = vmatpush2.msra.mxu0 0.0
    %177 = vmatprep.subr.mxu0 0.0
    %178 = vmatpush2.msra.mxu0 0.0
    %179 = vmatprep.subr.mxu0 0.0
    %180 = vmatpush2.msra.mxu0 0.0
    %181 = vmatprep.subr.mxu0 0.0
    %182 = vmatpush2.msra.mxu0 0.0
    %183 = vmatprep.subr.mxu0 0.0
    %184 = vmatpush2.msra.mxu0 0.0
    %185 = vmatprep.subr.mxu0 0.0
    %186 = vmatpush2.msra.mxu0 0.0
    %187 = vmatprep.subr.mxu0 0.0
    %188 = vmatpush2.msra.mxu0 0.0
    %189 = vmatprep.subr.mxu0 0.0
    %190 = vmatpush2.msra.mxu0 0.0
    %191 = vmatprep.subr.mxu0 0.0
    %192 = vmatpush2.msra.mxu0 0.0
    %193 = vmatprep.subr.mxu0 0.0
    %194 = vmatpush2.msra.mxu0 0.0
    %195 = vmatprep.mubr.f32.mxu0 0.0
    %196 = vmatmul.mubr.f32.gmra.mxu0 %v107
    %v197 = vpop.f32.mrf.mxu0
    %v198 = vadd.f32 %v129, %v197
    %v199 = vpop.f32.mrf.mxu0
    %200 = vdwg.mxu0
    %v201 = vtanh.pop %v198
    %202 = vst.msk [vmem:[#allocation2] sm:$0xff] %vm33, %v201
    // Predicated region
    $region22: #{tpu_custom_call.1} parent=1 // pred_check
      _
    $region23: #{tpu_custom_call.1} parent=1 // pred_check_branch
      %204 = sbr.rel (0) target = $region25
    $region24: #{tpu_custom_call.1} parent=1 // pred_region
      %s206 = ssub.s32 128, 128
      %207 = vsyncadd [#allocation3], %s206
      %s209 = sshll.u32 [#allocation2], 4
      %s210 = int_to_ptr.vmem [resolvable:$true] %s209
      %212 = dma.vmem_to_hbm [thread:$0]  %s210, 128, %s5, [#allocation3]
    $region25: #{tpu_custom_call.1} parent=1 // pred_fallthru
      _
    // Predicated region
    $region26: #{tpu_custom_call.1} parent=1 // pred_check
      _
    $region27: #{tpu_custom_call.1} parent=1 // pred_check_branch
      %214 = sbr.rel (0) target = $region29
    $region28: #{tpu_custom_call.1} parent=1 // pred_region
      %215 = dma.done [#allocation3], 128
    $region29: #{tpu_custom_call.1} parent=1 // pred_fallthru
      _
    %216 = vsyncpa [#allocation3], 1

</llo_original>
